<compile_context>
chip_gen: v6e
topology: v6e:2x2x1
jax: 0.10.0
libtpu: 0.0.40
codegen_flags: <defaults>
</compile_context>

<pallas_src>
import jax
import jax.numpy as jnp
from jax.experimental import pallas as pl
from jax.experimental.pallas import tpu as pltpu

INPUT_SIZE = 1
HIDDEN_SIZE = 40
OUTPUT_SIZE = 1

LANE = 128
SUBLANE = 8
PARAM_LEN = 128           # 3*HIDDEN_SIZE + 1 = 121 scalars, padded to 128


def make_mlp_kernel(tile_rows, chunk_rows):
    """Build a kernel for a (tile_rows, 128) batch tile, processed in
    (chunk_rows, 128) sub-chunks to bound vreg pressure."""
    n_chunks = tile_rows // chunk_rows

    def mlp_kernel(p_ref, x_ref, o_ref):
        # p_ref : SMEM f32[PARAM_LEN] packed params:
        #   [0:40] fc1.weight (fan_in=1), [40:80] fc1.bias,
        #   [80:120] fc2.weight, [120] fc2.bias.
        # x_ref : VMEM (tile_rows, 128)  batch, lane-dense 2-D layout
        # o_ref : VMEM (tile_rows, 128)
        b2 = p_ref[3 * HIDDEN_SIZE]
        for c in range(n_chunks):                      # static unroll
            r0 = c * chunk_rows
            xc = x_ref[pl.ds(r0, chunk_rows), :]       # (chunk_rows, 128)
            acc = jnp.zeros((chunk_rows, LANE), jnp.float32)
            # Pure-VALU scalar loop over hidden units: 5 ops / element / unit,
            # scalar operands read from SMEM (reads stay inside the loop so the
            # scalar live ranges stay short).
            for h in range(HIDDEN_SIZE):
                w1 = p_ref[h]
                b1 = p_ref[HIDDEN_SIZE + h]
                w2 = p_ref[2 * HIDDEN_SIZE + h]
                acc = acc + w2 * jnp.maximum(xc * w1 + b1, 0.0)
            o_ref[pl.ds(r0, chunk_rows), :] = acc + b2

    return mlp_kernel


def pack_params(w1, b1, w2, b2):
    """Pack PyTorch-layout params ONCE (outside the forward) into a 1-D
    f32[PARAM_LEN] array destined for SMEM."""
    p = jnp.zeros((PARAM_LEN,), jnp.float32)
    p = p.at[0:HIDDEN_SIZE].set(w1[:, 0].astype(jnp.float32))               # fc1.weight (H,1)
    p = p.at[HIDDEN_SIZE:2 * HIDDEN_SIZE].set(b1.astype(jnp.float32))       # fc1.bias   (H,)
    p = p.at[2 * HIDDEN_SIZE:3 * HIDDEN_SIZE].set(w2[0, :].astype(jnp.float32))  # fc2.weight (1,H)
    p = p.at[3 * HIDDEN_SIZE].set(b2[0].astype(jnp.float32))                # fc2.bias   (1,)
    return p


def net_forward(x, packed_params, *, max_tile_rows=256, tile_rows=None):
    """x: (B, INPUT_SIZE) -> (B, OUTPUT_SIZE), f32 throughout."""
    B = x.shape[0]
    rows = pl.cdiv(B, LANE)                     # number of 128-lane rows of batch

    if tile_rows is not None:
        # Explicit override (clamped to a positive multiple of 8 sublanes).
        tr = max(SUBLANE, (int(tile_rows) // SUBLANE) * SUBLANE)
    else:
        # Big tiles to amortize the ~0.35us per-grid-step overhead, but keep
        # >= ~8 grid steps on large batches so both v7x TensorCores get work.
        target = pl.cdiv(rows, 8)
        tr = ((target + SUBLANE - 1) // SUBLANE) * SUBLANE
        tr = max(SUBLANE, min(max_tile_rows, tr))

    rows_padded = pl.cdiv(rows, tr) * tr
    grid = rows_padded // tr

    # In-kernel sub-chunk rows: largest of (64,32,16,8) dividing the tile,
    # keeping live intermediates to <=~24 vregs.
    cr = SUBLANE
    for c in (64, 32, 16, 8):
        if tr % c == 0:
            cr = c
            break

    n_padded = rows_padded * LANE
    # Lane-dense 2-D batch slab, zero-padded to a whole number of tiles.
    xb = jnp.zeros((n_padded,), jnp.float32).at[:B].set(
        x[:, 0].astype(jnp.float32)).reshape(rows_padded, LANE)

    out = pl.pallas_call(
        make_mlp_kernel(tr, cr),
        out_shape=jax.ShapeDtypeStruct((rows_padded, LANE), jnp.float32),
        grid_spec=pltpu.PrefetchScalarGridSpec(
            num_scalar_prefetch=0,
            grid=(grid,),
            in_specs=[
                pl.BlockSpec(memory_space=pltpu.MemorySpace.SMEM),   # params (512 B)
                pl.BlockSpec((tr, LANE), lambda i: (i, 0)),          # x tile
            ],
            out_specs=pl.BlockSpec((tr, LANE), lambda i: (i, 0)),
        ),
        compiler_params=pltpu.CompilerParams(
            dimension_semantics=("parallel",)),
        cost_estimate=pl.CostEstimate(
            flops=5 * HIDDEN_SIZE * n_padded,      # ~200 VALU flops / element
            transcendentals=0,
            bytes_accessed=2 * 4 * n_padded),      # f32 in + f32 out
    )(packed_params, xb)

    return out.reshape(-1)[:B].reshape(B, OUTPUT_SIZE)


def init_params(key):
    """Deterministic init mimicking torch.nn.Linear default U(-1/sqrt(fan_in), +)."""
    k1, k2, k3, k4 = jax.random.split(key, 4)
    bound1 = 1.0 / (INPUT_SIZE ** 0.5)
    bound2 = 1.0 / (HIDDEN_SIZE ** 0.5)
    w1 = jax.random.uniform(k1, (HIDDEN_SIZE, INPUT_SIZE), jnp.float32,
                            minval=-bound1, maxval=bound1)
    b1 = jax.random.uniform(k2, (HIDDEN_SIZE,), jnp.float32,
                            minval=-bound1, maxval=bound1)
    w2 = jax.random.uniform(k3, (OUTPUT_SIZE, HIDDEN_SIZE), jnp.float32,
                            minval=-bound2, maxval=bound2)
    b2 = jax.random.uniform(k4, (OUTPUT_SIZE,), jnp.float32,
                            minval=-bound2, maxval=bound2)
    return w1, b1, w2, b2


if __name__ == "__main__":
    key = jax.random.PRNGKey(0)
    k_params, k_x1, k_x2 = jax.random.split(key, 3)
    w1, b1, w2, b2 = init_params(k_params)
    packed = pack_params(w1, b1, w2, b2)   # done once, outside the forward

    def ref(xv):
        return jnp.maximum(xv @ w1.T + b1, 0.0) @ w2.T + b2

    # 1) Tiny batch (B=8): single (8,128) tile, single grid step.
    x_small = jax.random.normal(k_x1, (8, INPUT_SIZE), jnp.float32)
    y_small = net_forward(x_small, packed)
    jax.block_until_ready(y_small)
    assert y_small.shape == (8, OUTPUT_SIZE)
    assert jnp.allclose(y_small, ref(x_small), atol=1e-5, rtol=1e-5)

    # 2) Multi-step grid + padding (B=1200 -> 10 rows -> tr=8 -> 2 grid steps).
    x_mid = jax.random.normal(k_x2, (1200, INPUT_SIZE), jnp.float32)
    y_mid = net_forward(x_mid, packed)
    jax.block_until_ready(y_mid)
    assert y_mid.shape == (1200, OUTPUT_SIZE)
    assert jnp.allclose(y_mid, ref(x_mid), atol=1e-5, rtol=1e-5)

    # 3) Large-tile path with the in-kernel chunk loop (tr=128 -> 2x 64-row chunks).
    y_big_tile = net_forward(x_mid, packed, tile_rows=128)
    jax.block_until_ready(y_big_tile)
    assert jnp.allclose(y_big_tile, ref(x_mid), atol=1e-5, rtol=1e-5)

    print("KERNEL_OK")
</pallas_src>

<mosaic_0001>
module attributes {stable_mosaic.version = 11 : i64} {
  func.func @mlp_kernel(%arg0: i32, %arg1: memref<128xf32, #tpu.memory_space<smem>>, %arg2: memref<8x128xf32, #tpu.memory_space<vmem>>, %arg3: memref<8x128xf32, #tpu.memory_space<vmem>>) attributes {dimension_semantics = [#tpu.dimension_semantics<parallel>], iteration_bounds = array<i64: 1>, scalar_prefetch = 0 : i64, scratch_operands = 0 : i64, tpu.core_type = #tpu.core_type<tc>, window_params = [{transform_indices = @transform_0, window_bounds = array<i64: 128>}, {transform_indices = @transform_1, window_bounds = array<i64: 8, 128>}, {transform_indices = @transform_2, window_bounds = array<i64: 8, 128>}]} {
    %c120 = arith.constant 120 : index
    %0 = memref.load %arg1[%c120] : memref<128xf32, #tpu.memory_space<smem>>
    %c0 = arith.constant 0 : index
    %c0_0 = arith.constant 0 : index
    %1 = vector.load %arg2[%c0, %c0_0] : memref<8x128xf32, #tpu.memory_space<vmem>>, vector<8x128xf32>
    %cst = arith.constant 0.000000e+00 : f32
    %2 = vector.broadcast %cst : f32 to vector<8x128xf32>
    %c0_1 = arith.constant 0 : index
    %3 = memref.load %arg1[%c0_1] : memref<128xf32, #tpu.memory_space<smem>>
    %c40 = arith.constant 40 : index
    %4 = memref.load %arg1[%c40] : memref<128xf32, #tpu.memory_space<smem>>
    %c80 = arith.constant 80 : index
    %5 = memref.load %arg1[%c80] : memref<128xf32, #tpu.memory_space<smem>>
    %6 = vector.broadcast %3 : f32 to vector<8x128xf32>
    %7 = arith.mulf %1, %6 : vector<8x128xf32>
    %8 = vector.broadcast %4 : f32 to vector<8x128xf32>
    %9 = arith.addf %7, %8 : vector<8x128xf32>
    %cst_2 = arith.constant 0.000000e+00 : f32
    %10 = vector.broadcast %cst_2 : f32 to vector<8x128xf32>
    %11 = arith.maximumf %9, %10 : vector<8x128xf32>
    %12 = vector.broadcast %5 : f32 to vector<8x128xf32>
    %13 = arith.mulf %12, %11 : vector<8x128xf32>
    %14 = arith.addf %2, %13 : vector<8x128xf32>
    %c1 = arith.constant 1 : index
    %15 = memref.load %arg1[%c1] : memref<128xf32, #tpu.memory_space<smem>>
    %c41 = arith.constant 41 : index
    %16 = memref.load %arg1[%c41] : memref<128xf32, #tpu.memory_space<smem>>
    %c81 = arith.constant 81 : index
    %17 = memref.load %arg1[%c81] : memref<128xf32, #tpu.memory_space<smem>>
    %18 = vector.broadcast %15 : f32 to vector<8x128xf32>
    %19 = arith.mulf %1, %18 : vector<8x128xf32>
    %20 = vector.broadcast %16 : f32 to vector<8x128xf32>
    %21 = arith.addf %19, %20 : vector<8x128xf32>
    %cst_3 = arith.constant 0.000000e+00 : f32
    %22 = vector.broadcast %cst_3 : f32 to vector<8x128xf32>
    %23 = arith.maximumf %21, %22 : vector<8x128xf32>
    %24 = vector.broadcast %17 : f32 to vector<8x128xf32>
    %25 = arith.mulf %24, %23 : vector<8x128xf32>
    %26 = arith.addf %14, %25 : vector<8x128xf32>
    %c2 = arith.constant 2 : index
    %27 = memref.load %arg1[%c2] : memref<128xf32, #tpu.memory_space<smem>>
    %c42 = arith.constant 42 : index
    %28 = memref.load %arg1[%c42] : memref<128xf32, #tpu.memory_space<smem>>
    %c82 = arith.constant 82 : index
    %29 = memref.load %arg1[%c82] : memref<128xf32, #tpu.memory_space<smem>>
    %30 = vector.broadcast %27 : f32 to vector<8x128xf32>
    %31 = arith.mulf %1, %30 : vector<8x128xf32>
    %32 = vector.broadcast %28 : f32 to vector<8x128xf32>
    %33 = arith.addf %31, %32 : vector<8x128xf32>
    %cst_4 = arith.constant 0.000000e+00 : f32
    %34 = vector.broadcast %cst_4 : f32 to vector<8x128xf32>
    %35 = arith.maximumf %33, %34 : vector<8x128xf32>
    %36 = vector.broadcast %29 : f32 to vector<8x128xf32>
    %37 = arith.mulf %36, %35 : vector<8x128xf32>
    %38 = arith.addf %26, %37 : vector<8x128xf32>
    %c3 = arith.constant 3 : index
    %39 = memref.load %arg1[%c3] : memref<128xf32, #tpu.memory_space<smem>>
    %c43 = arith.constant 43 : index
    %40 = memref.load %arg1[%c43] : memref<128xf32, #tpu.memory_space<smem>>
    %c83 = arith.constant 83 : index
    %41 = memref.load %arg1[%c83] : memref<128xf32, #tpu.memory_space<smem>>
    %42 = vector.broadcast %39 : f32 to vector<8x128xf32>
    %43 = arith.mulf %1, %42 : vector<8x128xf32>
    %44 = vector.broadcast %40 : f32 to vector<8x128xf32>
    %45 = arith.addf %43, %44 : vector<8x128xf32>
    %cst_5 = arith.constant 0.000000e+00 : f32
    %46 = vector.broadcast %cst_5 : f32 to vector<8x128xf32>
    %47 = arith.maximumf %45, %46 : vector<8x128xf32>
    %48 = vector.broadcast %41 : f32 to vector<8x128xf32>
    %49 = arith.mulf %48, %47 : vector<8x128xf32>
    %50 = arith.addf %38, %49 : vector<8x128xf32>
    %c4 = arith.constant 4 : index
    %51 = memref.load %arg1[%c4] : memref<128xf32, #tpu.memory_space<smem>>
    %c44 = arith.constant 44 : index
    %52 = memref.load %arg1[%c44] : memref<128xf32, #tpu.memory_space<smem>>
    %c84 = arith.constant 84 : index
    %53 = memref.load %arg1[%c84] : memref<128xf32, #tpu.memory_space<smem>>
    %54 = vector.broadcast %51 : f32 to vector<8x128xf32>
    %55 = arith.mulf %1, %54 : vector<8x128xf32>
    %56 = vector.broadcast %52 : f32 to vector<8x128xf32>
    %57 = arith.addf %55, %56 : vector<8x128xf32>
    %cst_6 = arith.constant 0.000000e+00 : f32
    %58 = vector.broadcast %cst_6 : f32 to vector<8x128xf32>
    %59 = arith.maximumf %57, %58 : vector<8x128xf32>
    %60 = vector.broadcast %53 : f32 to vector<8x128xf32>
    %61 = arith.mulf %60, %59 : vector<8x128xf32>
    %62 = arith.addf %50, %61 : vector<8x128xf32>
    %c5 = arith.constant 5 : index
    %63 = memref.load %arg1[%c5] : memref<128xf32, #tpu.memory_space<smem>>
    %c45 = arith.constant 45 : index
    %64 = memref.load %arg1[%c45] : memref<128xf32, #tpu.memory_space<smem>>
    %c85 = arith.constant 85 : index
    %65 = memref.load %arg1[%c85] : memref<128xf32, #tpu.memory_space<smem>>
    %66 = vector.broadcast %63 : f32 to vector<8x128xf32>
    %67 = arith.mulf %1, %66 : vector<8x128xf32>
    %68 = vector.broadcast %64 : f32 to vector<8x128xf32>
    %69 = arith.addf %67, %68 : vector<8x128xf32>
    %cst_7 = arith.constant 0.000000e+00 : f32
    %70 = vector.broadcast %cst_7 : f32 to vector<8x128xf32>
    %71 = arith.maximumf %69, %70 : vector<8x128xf32>
    %72 = vector.broadcast %65 : f32 to vector<8x128xf32>
    %73 = arith.mulf %72, %71 : vector<8x128xf32>
    %74 = arith.addf %62, %73 : vector<8x128xf32>
    %c6 = arith.constant 6 : index
    %75 = memref.load %arg1[%c6] : memref<128xf32, #tpu.memory_space<smem>>
    %c46 = arith.constant 46 : index
    %76 = memref.load %arg1[%c46] : memref<128xf32, #tpu.memory_space<smem>>
    %c86 = arith.constant 86 : index
    %77 = memref.load %arg1[%c86] : memref<128xf32, #tpu.memory_space<smem>>
    %78 = vector.broadcast %75 : f32 to vector<8x128xf32>
    %79 = arith.mulf %1, %78 : vector<8x128xf32>
    %80 = vector.broadcast %76 : f32 to vector<8x128xf32>
    %81 = arith.addf %79, %80 : vector<8x128xf32>
    %cst_8 = arith.constant 0.000000e+00 : f32
    %82 = vector.broadcast %cst_8 : f32 to vector<8x128xf32>
    %83 = arith.maximumf %81, %82 : vector<8x128xf32>
    %84 = vector.broadcast %77 : f32 to vector<8x128xf32>
    %85 = arith.mulf %84, %83 : vector<8x128xf32>
    %86 = arith.addf %74, %85 : vector<8x128xf32>
    %c7 = arith.constant 7 : index
    %87 = memref.load %arg1[%c7] : memref<128xf32, #tpu.memory_space<smem>>
    %c47 = arith.constant 47 : index
    %88 = memref.load %arg1[%c47] : memref<128xf32, #tpu.memory_space<smem>>
    %c87 = arith.constant 87 : index
    %89 = memref.load %arg1[%c87] : memref<128xf32, #tpu.memory_space<smem>>
    %90 = vector.broadcast %87 : f32 to vector<8x128xf32>
    %91 = arith.mulf %1, %90 : vector<8x128xf32>
    %92 = vector.broadcast %88 : f32 to vector<8x128xf32>
    %93 = arith.addf %91, %92 : vector<8x128xf32>
    %cst_9 = arith.constant 0.000000e+00 : f32
    %94 = vector.broadcast %cst_9 : f32 to vector<8x128xf32>
    %95 = arith.maximumf %93, %94 : vector<8x128xf32>
    %96 = vector.broadcast %89 : f32 to vector<8x128xf32>
    %97 = arith.mulf %96, %95 : vector<8x128xf32>
    %98 = arith.addf %86, %97 : vector<8x128xf32>
    %c8 = arith.constant 8 : index
    %99 = memref.load %arg1[%c8] : memref<128xf32, #tpu.memory_space<smem>>
    %c48 = arith.constant 48 : index
    %100 = memref.load %arg1[%c48] : memref<128xf32, #tpu.memory_space<smem>>
    %c88 = arith.constant 88 : index
    %101 = memref.load %arg1[%c88] : memref<128xf32, #tpu.memory_space<smem>>
    %102 = vector.broadcast %99 : f32 to vector<8x128xf32>
    %103 = arith.mulf %1, %102 : vector<8x128xf32>
    %104 = vector.broadcast %100 : f32 to vector<8x128xf32>
    %105 = arith.addf %103, %104 : vector<8x128xf32>
    %cst_10 = arith.constant 0.000000e+00 : f32
    %106 = vector.broadcast %cst_10 : f32 to vector<8x128xf32>
    %107 = arith.maximumf %105, %106 : vector<8x128xf32>
    %108 = vector.broadcast %101 : f32 to vector<8x128xf32>
    %109 = arith.mulf %108, %107 : vector<8x128xf32>
    %110 = arith.addf %98, %109 : vector<8x128xf32>
    %c9 = arith.constant 9 : index
    %111 = memref.load %arg1[%c9] : memref<128xf32, #tpu.memory_space<smem>>
    %c49 = arith.constant 49 : index
    %112 = memref.load %arg1[%c49] : memref<128xf32, #tpu.memory_space<smem>>
    %c89 = arith.constant 89 : index
    %113 = memref.load %arg1[%c89] : memref<128xf32, #tpu.memory_space<smem>>
    %114 = vector.broadcast %111 : f32 to vector<8x128xf32>
    %115 = arith.mulf %1, %114 : vector<8x128xf32>
    %116 = vector.broadcast %112 : f32 to vector<8x128xf32>
    %117 = arith.addf %115, %116 : vector<8x128xf32>
    %cst_11 = arith.constant 0.000000e+00 : f32
    %118 = vector.broadcast %cst_11 : f32 to vector<8x128xf32>
    %119 = arith.maximumf %117, %118 : vector<8x128xf32>
    %120 = vector.broadcast %113 : f32 to vector<8x128xf32>
    %121 = arith.mulf %120, %119 : vector<8x128xf32>
    %122 = arith.addf %110, %121 : vector<8x128xf32>
    %c10 = arith.constant 10 : index
    %123 = memref.load %arg1[%c10] : memref<128xf32, #tpu.memory_space<smem>>
    %c50 = arith.constant 50 : index
    %124 = memref.load %arg1[%c50] : memref<128xf32, #tpu.memory_space<smem>>
    %c90 = arith.constant 90 : index
    %125 = memref.load %arg1[%c90] : memref<128xf32, #tpu.memory_space<smem>>
    %126 = vector.broadcast %123 : f32 to vector<8x128xf32>
    %127 = arith.mulf %1, %126 : vector<8x128xf32>
    %128 = vector.broadcast %124 : f32 to vector<8x128xf32>
    %129 = arith.addf %127, %128 : vector<8x128xf32>
    %cst_12 = arith.constant 0.000000e+00 : f32
    %130 = vector.broadcast %cst_12 : f32 to vector<8x128xf32>
    %131 = arith.maximumf %129, %130 : vector<8x128xf32>
    %132 = vector.broadcast %125 : f32 to vector<8x128xf32>
    %133 = arith.mulf %132, %131 : vector<8x128xf32>
    %134 = arith.addf %122, %133 : vector<8x128xf32>
    %c11 = arith.constant 11 : index
    %135 = memref.load %arg1[%c11] : memref<128xf32, #tpu.memory_space<smem>>
    %c51 = arith.constant 51 : index
    %136 = memref.load %arg1[%c51] : memref<128xf32, #tpu.memory_space<smem>>
    %c91 = arith.constant 91 : index
    %137 = memref.load %arg1[%c91] : memref<128xf32, #tpu.memory_space<smem>>
    %138 = vector.broadcast %135 : f32 to vector<8x128xf32>
    %139 = arith.mulf %1, %138 : vector<8x128xf32>
    %140 = vector.broadcast %136 : f32 to vector<8x128xf32>
    %141 = arith.addf %139, %140 : vector<8x128xf32>
    %cst_13 = arith.constant 0.000000e+00 : f32
    %142 = vector.broadcast %cst_13 : f32 to vector<8x128xf32>
    %143 = arith.maximumf %141, %142 : vector<8x128xf32>
    %144 = vector.broadcast %137 : f32 to vector<8x128xf32>
    %145 = arith.mulf %144, %143 : vector<8x128xf32>
    %146 = arith.addf %134, %145 : vector<8x128xf32>
    %c12 = arith.constant 12 : index
    %147 = memref.load %arg1[%c12] : memref<128xf32, #tpu.memory_space<smem>>
    %c52 = arith.constant 52 : index
    %148 = memref.load %arg1[%c52] : memref<128xf32, #tpu.memory_space<smem>>
    %c92 = arith.constant 92 : index
    %149 = memref.load %arg1[%c92] : memref<128xf32, #tpu.memory_space<smem>>
    %150 = vector.broadcast %147 : f32 to vector<8x128xf32>
    %151 = arith.mulf %1, %150 : vector<8x128xf32>
    %152 = vector.broadcast %148 : f32 to vector<8x128xf32>
    %153 = arith.addf %151, %152 : vector<8x128xf32>
    %cst_14 = arith.constant 0.000000e+00 : f32
    %154 = vector.broadcast %cst_14 : f32 to vector<8x128xf32>
    %155 = arith.maximumf %153, %154 : vector<8x128xf32>
    %156 = vector.broadcast %149 : f32 to vector<8x128xf32>
    %157 = arith.mulf %156, %155 : vector<8x128xf32>
    %158 = arith.addf %146, %157 : vector<8x128xf32>
    %c13 = arith.constant 13 : index
    %159 = memref.load %arg1[%c13] : memref<128xf32, #tpu.memory_space<smem>>
    %c53 = arith.constant 53 : index
    %160 = memref.load %arg1[%c53] : memref<128xf32, #tpu.memory_space<smem>>
    %c93 = arith.constant 93 : index
    %161 = memref.load %arg1[%c93] : memref<128xf32, #tpu.memory_space<smem>>
    %162 = vector.broadcast %159 : f32 to vector<8x128xf32>
    %163 = arith.mulf %1, %162 : vector<8x128xf32>
    %164 = vector.broadcast %160 : f32 to vector<8x128xf32>
    %165 = arith.addf %163, %164 : vector<8x128xf32>
    %cst_15 = arith.constant 0.000000e+00 : f32
    %166 = vector.broadcast %cst_15 : f32 to vector<8x128xf32>
    %167 = arith.maximumf %165, %166 : vector<8x128xf32>
    %168 = vector.broadcast %161 : f32 to vector<8x128xf32>
    %169 = arith.mulf %168, %167 : vector<8x128xf32>
    %170 = arith.addf %158, %169 : vector<8x128xf32>
    %c14 = arith.constant 14 : index
    %171 = memref.load %arg1[%c14] : memref<128xf32, #tpu.memory_space<smem>>
    %c54 = arith.constant 54 : index
    %172 = memref.load %arg1[%c54] : memref<128xf32, #tpu.memory_space<smem>>
    %c94 = arith.constant 94 : index
    %173 = memref.load %arg1[%c94] : memref<128xf32, #tpu.memory_space<smem>>
    %174 = vector.broadcast %171 : f32 to vector<8x128xf32>
    %175 = arith.mulf %1, %174 : vector<8x128xf32>
    %176 = vector.broadcast %172 : f32 to vector<8x128xf32>
    %177 = arith.addf %175, %176 : vector<8x128xf32>
    %cst_16 = arith.constant 0.000000e+00 : f32
    %178 = vector.broadcast %cst_16 : f32 to vector<8x128xf32>
    %179 = arith.maximumf %177, %178 : vector<8x128xf32>
    %180 = vector.broadcast %173 : f32 to vector<8x128xf32>
    %181 = arith.mulf %180, %179 : vector<8x128xf32>
    %182 = arith.addf %170, %181 : vector<8x128xf32>
    %c15 = arith.constant 15 : index
    %183 = memref.load %arg1[%c15] : memref<128xf32, #tpu.memory_space<smem>>
    %c55 = arith.constant 55 : index
    %184 = memref.load %arg1[%c55] : memref<128xf32, #tpu.memory_space<smem>>
    %c95 = arith.constant 95 : index
    %185 = memref.load %arg1[%c95] : memref<128xf32, #tpu.memory_space<smem>>
    %186 = vector.broadcast %183 : f32 to vector<8x128xf32>
    %187 = arith.mulf %1, %186 : vector<8x128xf32>
    %188 = vector.broadcast %184 : f32 to vector<8x128xf32>
    %189 = arith.addf %187, %188 : vector<8x128xf32>
    %cst_17 = arith.constant 0.000000e+00 : f32
    %190 = vector.broadcast %cst_17 : f32 to vector<8x128xf32>
    %191 = arith.maximumf %189, %190 : vector<8x128xf32>
    %192 = vector.broadcast %185 : f32 to vector<8x128xf32>
    %193 = arith.mulf %192, %191 : vector<8x128xf32>
    %194 = arith.addf %182, %193 : vector<8x128xf32>
    %c16 = arith.constant 16 : index
    %195 = memref.load %arg1[%c16] : memref<128xf32, #tpu.memory_space<smem>>
    %c56 = arith.constant 56 : index
    %196 = memref.load %arg1[%c56] : memref<128xf32, #tpu.memory_space<smem>>
    %c96 = arith.constant 96 : index
    %197 = memref.load %arg1[%c96] : memref<128xf32, #tpu.memory_space<smem>>
    %198 = vector.broadcast %195 : f32 to vector<8x128xf32>
    %199 = arith.mulf %1, %198 : vector<8x128xf32>
    %200 = vector.broadcast %196 : f32 to vector<8x128xf32>
    %201 = arith.addf %199, %200 : vector<8x128xf32>
    %cst_18 = arith.constant 0.000000e+00 : f32
    %202 = vector.broadcast %cst_18 : f32 to vector<8x128xf32>
    %203 = arith.maximumf %201, %202 : vector<8x128xf32>
    %204 = vector.broadcast %197 : f32 to vector<8x128xf32>
    %205 = arith.mulf %204, %203 : vector<8x128xf32>
    %206 = arith.addf %194, %205 : vector<8x128xf32>
    %c17 = arith.constant 17 : index
    %207 = memref.load %arg1[%c17] : memref<128xf32, #tpu.memory_space<smem>>
    %c57 = arith.constant 57 : index
    %208 = memref.load %arg1[%c57] : memref<128xf32, #tpu.memory_space<smem>>
    %c97 = arith.constant 97 : index
    %209 = memref.load %arg1[%c97] : memref<128xf32, #tpu.memory_space<smem>>
    %210 = vector.broadcast %207 : f32 to vector<8x128xf32>
    %211 = arith.mulf %1, %210 : vector<8x128xf32>
    %212 = vector.broadcast %208 : f32 to vector<8x128xf32>
    %213 = arith.addf %211, %212 : vector<8x128xf32>
    %cst_19 = arith.constant 0.000000e+00 : f32
    %214 = vector.broadcast %cst_19 : f32 to vector<8x128xf32>
    %215 = arith.maximumf %213, %214 : vector<8x128xf32>
    %216 = vector.broadcast %209 : f32 to vector<8x128xf32>
    %217 = arith.mulf %216, %215 : vector<8x128xf32>
    %218 = arith.addf %206, %217 : vector<8x128xf32>
    %c18 = arith.constant 18 : index
    %219 = memref.load %arg1[%c18] : memref<128xf32, #tpu.memory_space<smem>>
    %c58 = arith.constant 58 : index
    %220 = memref.load %arg1[%c58] : memref<128xf32, #tpu.memory_space<smem>>
    %c98 = arith.constant 98 : index
    %221 = memref.load %arg1[%c98] : memref<128xf32, #tpu.memory_space<smem>>
    %222 = vector.broadcast %219 : f32 to vector<8x128xf32>
    %223 = arith.mulf %1, %222 : vector<8x128xf32>
    %224 = vector.broadcast %220 : f32 to vector<8x128xf32>
    %225 = arith.addf %223, %224 : vector<8x128xf32>
    %cst_20 = arith.constant 0.000000e+00 : f32
    %226 = vector.broadcast %cst_20 : f32 to vector<8x128xf32>
    %227 = arith.maximumf %225, %226 : vector<8x128xf32>
    %228 = vector.broadcast %221 : f32 to vector<8x128xf32>
    %229 = arith.mulf %228, %227 : vector<8x128xf32>
    %230 = arith.addf %218, %229 : vector<8x128xf32>
    %c19 = arith.constant 19 : index
    %231 = memref.load %arg1[%c19] : memref<128xf32, #tpu.memory_space<smem>>
    %c59 = arith.constant 59 : index
    %232 = memref.load %arg1[%c59] : memref<128xf32, #tpu.memory_space<smem>>
    %c99 = arith.constant 99 : index
    %233 = memref.load %arg1[%c99] : memref<128xf32, #tpu.memory_space<smem>>
    %234 = vector.broadcast %231 : f32 to vector<8x128xf32>
    %235 = arith.mulf %1, %234 : vector<8x128xf32>
    %236 = vector.broadcast %232 : f32 to vector<8x128xf32>
    %237 = arith.addf %235, %236 : vector<8x128xf32>
    %cst_21 = arith.constant 0.000000e+00 : f32
    %238 = vector.broadcast %cst_21 : f32 to vector<8x128xf32>
    %239 = arith.maximumf %237, %238 : vector<8x128xf32>
    %240 = vector.broadcast %233 : f32 to vector<8x128xf32>
    %241 = arith.mulf %240, %239 : vector<8x128xf32>
    %242 = arith.addf %230, %241 : vector<8x128xf32>
    %c20 = arith.constant 20 : index
    %243 = memref.load %arg1[%c20] : memref<128xf32, #tpu.memory_space<smem>>
    %c60 = arith.constant 60 : index
    %244 = memref.load %arg1[%c60] : memref<128xf32, #tpu.memory_space<smem>>
    %c100 = arith.constant 100 : index
    %245 = memref.load %arg1[%c100] : memref<128xf32, #tpu.memory_space<smem>>
    %246 = vector.broadcast %243 : f32 to vector<8x128xf32>
    %247 = arith.mulf %1, %246 : vector<8x128xf32>
    %248 = vector.broadcast %244 : f32 to vector<8x128xf32>
    %249 = arith.addf %247, %248 : vector<8x128xf32>
    %cst_22 = arith.constant 0.000000e+00 : f32
    %250 = vector.broadcast %cst_22 : f32 to vector<8x128xf32>
    %251 = arith.maximumf %249, %250 : vector<8x128xf32>
    %252 = vector.broadcast %245 : f32 to vector<8x128xf32>
    %253 = arith.mulf %252, %251 : vector<8x128xf32>
    %254 = arith.addf %242, %253 : vector<8x128xf32>
    %c21 = arith.constant 21 : index
    %255 = memref.load %arg1[%c21] : memref<128xf32, #tpu.memory_space<smem>>
    %c61 = arith.constant 61 : index
    %256 = memref.load %arg1[%c61] : memref<128xf32, #tpu.memory_space<smem>>
    %c101 = arith.constant 101 : index
    %257 = memref.load %arg1[%c101] : memref<128xf32, #tpu.memory_space<smem>>
    %258 = vector.broadcast %255 : f32 to vector<8x128xf32>
    %259 = arith.mulf %1, %258 : vector<8x128xf32>
    %260 = vector.broadcast %256 : f32 to vector<8x128xf32>
    %261 = arith.addf %259, %260 : vector<8x128xf32>
    %cst_23 = arith.constant 0.000000e+00 : f32
    %262 = vector.broadcast %cst_23 : f32 to vector<8x128xf32>
    %263 = arith.maximumf %261, %262 : vector<8x128xf32>
    %264 = vector.broadcast %257 : f32 to vector<8x128xf32>
    %265 = arith.mulf %264, %263 : vector<8x128xf32>
    %266 = arith.addf %254, %265 : vector<8x128xf32>
    %c22 = arith.constant 22 : index
    %267 = memref.load %arg1[%c22] : memref<128xf32, #tpu.memory_space<smem>>
    %c62 = arith.constant 62 : index
    %268 = memref.load %arg1[%c62] : memref<128xf32, #tpu.memory_space<smem>>
    %c102 = arith.constant 102 : index
    %269 = memref.load %arg1[%c102] : memref<128xf32, #tpu.memory_space<smem>>
    %270 = vector.broadcast %267 : f32 to vector<8x128xf32>
    %271 = arith.mulf %1, %270 : vector<8x128xf32>
    %272 = vector.broadcast %268 : f32 to vector<8x128xf32>
    %273 = arith.addf %271, %272 : vector<8x128xf32>
    %cst_24 = arith.constant 0.000000e+00 : f32
    %274 = vector.broadcast %cst_24 : f32 to vector<8x128xf32>
    %275 = arith.maximumf %273, %274 : vector<8x128xf32>
    %276 = vector.broadcast %269 : f32 to vector<8x128xf32>
    %277 = arith.mulf %276, %275 : vector<8x128xf32>
    %278 = arith.addf %266, %277 : vector<8x128xf32>
    %c23 = arith.constant 23 : index
    %279 = memref.load %arg1[%c23] : memref<128xf32, #tpu.memory_space<smem>>
    %c63 = arith.constant 63 : index
    %280 = memref.load %arg1[%c63] : memref<128xf32, #tpu.memory_space<smem>>
    %c103 = arith.constant 103 : index
    %281 = memref.load %arg1[%c103] : memref<128xf32, #tpu.memory_space<smem>>
    %282 = vector.broadcast %279 : f32 to vector<8x128xf32>
    %283 = arith.mulf %1, %282 : vector<8x128xf32>
    %284 = vector.broadcast %280 : f32 to vector<8x128xf32>
    %285 = arith.addf %283, %284 : vector<8x128xf32>
    %cst_25 = arith.constant 0.000000e+00 : f32
    %286 = vector.broadcast %cst_25 : f32 to vector<8x128xf32>
    %287 = arith.maximumf %285, %286 : vector<8x128xf32>
    %288 = vector.broadcast %281 : f32 to vector<8x128xf32>
    %289 = arith.mulf %288, %287 : vector<8x128xf32>
    %290 = arith.addf %278, %289 : vector<8x128xf32>
    %c24 = arith.constant 24 : index
    %291 = memref.load %arg1[%c24] : memref<128xf32, #tpu.memory_space<smem>>
    %c64 = arith.constant 64 : index
    %292 = memref.load %arg1[%c64] : memref<128xf32, #tpu.memory_space<smem>>
    %c104 = arith.constant 104 : index
    %293 = memref.load %arg1[%c104] : memref<128xf32, #tpu.memory_space<smem>>
    %294 = vector.broadcast %291 : f32 to vector<8x128xf32>
    %295 = arith.mulf %1, %294 : vector<8x128xf32>
    %296 = vector.broadcast %292 : f32 to vector<8x128xf32>
    %297 = arith.addf %295, %296 : vector<8x128xf32>
    %cst_26 = arith.constant 0.000000e+00 : f32
    %298 = vector.broadcast %cst_26 : f32 to vector<8x128xf32>
    %299 = arith.maximumf %297, %298 : vector<8x128xf32>
    %300 = vector.broadcast %293 : f32 to vector<8x128xf32>
    %301 = arith.mulf %300, %299 : vector<8x128xf32>
    %302 = arith.addf %290, %301 : vector<8x128xf32>
    %c25 = arith.constant 25 : index
    %303 = memref.load %arg1[%c25] : memref<128xf32, #tpu.memory_space<smem>>
    %c65 = arith.constant 65 : index
    %304 = memref.load %arg1[%c65] : memref<128xf32, #tpu.memory_space<smem>>
    %c105 = arith.constant 105 : index
    %305 = memref.load %arg1[%c105] : memref<128xf32, #tpu.memory_space<smem>>
    %306 = vector.broadcast %303 : f32 to vector<8x128xf32>
    %307 = arith.mulf %1, %306 : vector<8x128xf32>
    %308 = vector.broadcast %304 : f32 to vector<8x128xf32>
    %309 = arith.addf %307, %308 : vector<8x128xf32>
    %cst_27 = arith.constant 0.000000e+00 : f32
    %310 = vector.broadcast %cst_27 : f32 to vector<8x128xf32>
    %311 = arith.maximumf %309, %310 : vector<8x128xf32>
    %312 = vector.broadcast %305 : f32 to vector<8x128xf32>
    %313 = arith.mulf %312, %311 : vector<8x128xf32>
    %314 = arith.addf %302, %313 : vector<8x128xf32>
    %c26 = arith.constant 26 : index
    %315 = memref.load %arg1[%c26] : memref<128xf32, #tpu.memory_space<smem>>
    %c66 = arith.constant 66 : index
    %316 = memref.load %arg1[%c66] : memref<128xf32, #tpu.memory_space<smem>>
    %c106 = arith.constant 106 : index
    %317 = memref.load %arg1[%c106] : memref<128xf32, #tpu.memory_space<smem>>
    %318 = vector.broadcast %315 : f32 to vector<8x128xf32>
    %319 = arith.mulf %1, %318 : vector<8x128xf32>
    %320 = vector.broadcast %316 : f32 to vector<8x128xf32>
    %321 = arith.addf %319, %320 : vector<8x128xf32>
    %cst_28 = arith.constant 0.000000e+00 : f32
    %322 = vector.broadcast %cst_28 : f32 to vector<8x128xf32>
    %323 = arith.maximumf %321, %322 : vector<8x128xf32>
    %324 = vector.broadcast %317 : f32 to vector<8x128xf32>
    %325 = arith.mulf %324, %323 : vector<8x128xf32>
    %326 = arith.addf %314, %325 : vector<8x128xf32>
    %c27 = arith.constant 27 : index
    %327 = memref.load %arg1[%c27] : memref<128xf32, #tpu.memory_space<smem>>
    %c67 = arith.constant 67 : index
    %328 = memref.load %arg1[%c67] : memref<128xf32, #tpu.memory_space<smem>>
    %c107 = arith.constant 107 : index
    %329 = memref.load %arg1[%c107] : memref<128xf32, #tpu.memory_space<smem>>
    %330 = vector.broadcast %327 : f32 to vector<8x128xf32>
    %331 = arith.mulf %1, %330 : vector<8x128xf32>
    %332 = vector.broadcast %328 : f32 to vector<8x128xf32>
    %333 = arith.addf %331, %332 : vector<8x128xf32>
    %cst_29 = arith.constant 0.000000e+00 : f32
    %334 = vector.broadcast %cst_29 : f32 to vector<8x128xf32>
    %335 = arith.maximumf %333, %334 : vector<8x128xf32>
    %336 = vector.broadcast %329 : f32 to vector<8x128xf32>
    %337 = arith.mulf %336, %335 : vector<8x128xf32>
    %338 = arith.addf %326, %337 : vector<8x128xf32>
    %c28 = arith.constant 28 : index
    %339 = memref.load %arg1[%c28] : memref<128xf32, #tpu.memory_space<smem>>
    %c68 = arith.constant 68 : index
    %340 = memref.load %arg1[%c68] : memref<128xf32, #tpu.memory_space<smem>>
    %c108 = arith.constant 108 : index
    %341 = memref.load %arg1[%c108] : memref<128xf32, #tpu.memory_space<smem>>
    %342 = vector.broadcast %339 : f32 to vector<8x128xf32>
    %343 = arith.mulf %1, %342 : vector<8x128xf32>
    %344 = vector.broadcast %340 : f32 to vector<8x128xf32>
    %345 = arith.addf %343, %344 : vector<8x128xf32>
    %cst_30 = arith.constant 0.000000e+00 : f32
    %346 = vector.broadcast %cst_30 : f32 to vector<8x128xf32>
    %347 = arith.maximumf %345, %346 : vector<8x128xf32>
    %348 = vector.broadcast %341 : f32 to vector<8x128xf32>
    %349 = arith.mulf %348, %347 : vector<8x128xf32>
    %350 = arith.addf %338, %349 : vector<8x128xf32>
    %c29 = arith.constant 29 : index
    %351 = memref.load %arg1[%c29] : memref<128xf32, #tpu.memory_space<smem>>
    %c69 = arith.constant 69 : index
    %352 = memref.load %arg1[%c69] : memref<128xf32, #tpu.memory_space<smem>>
    %c109 = arith.constant 109 : index
    %353 = memref.load %arg1[%c109] : memref<128xf32, #tpu.memory_space<smem>>
    %354 = vector.broadcast %351 : f32 to vector<8x128xf32>
    %355 = arith.mulf %1, %354 : vector<8x128xf32>
    %356 = vector.broadcast %352 : f32 to vector<8x128xf32>
    %357 = arith.addf %355, %356 : vector<8x128xf32>
    %cst_31 = arith.constant 0.000000e+00 : f32
    %358 = vector.broadcast %cst_31 : f32 to vector<8x128xf32>
    %359 = arith.maximumf %357, %358 : vector<8x128xf32>
    %360 = vector.broadcast %353 : f32 to vector<8x128xf32>
    %361 = arith.mulf %360, %359 : vector<8x128xf32>
    %362 = arith.addf %350, %361 : vector<8x128xf32>
    %c30 = arith.constant 30 : index
    %363 = memref.load %arg1[%c30] : memref<128xf32, #tpu.memory_space<smem>>
    %c70 = arith.constant 70 : index
    %364 = memref.load %arg1[%c70] : memref<128xf32, #tpu.memory_space<smem>>
    %c110 = arith.constant 110 : index
    %365 = memref.load %arg1[%c110] : memref<128xf32, #tpu.memory_space<smem>>
    %366 = vector.broadcast %363 : f32 to vector<8x128xf32>
    %367 = arith.mulf %1, %366 : vector<8x128xf32>
    %368 = vector.broadcast %364 : f32 to vector<8x128xf32>
    %369 = arith.addf %367, %368 : vector<8x128xf32>
    %cst_32 = arith.constant 0.000000e+00 : f32
    %370 = vector.broadcast %cst_32 : f32 to vector<8x128xf32>
    %371 = arith.maximumf %369, %370 : vector<8x128xf32>
    %372 = vector.broadcast %365 : f32 to vector<8x128xf32>
    %373 = arith.mulf %372, %371 : vector<8x128xf32>
    %374 = arith.addf %362, %373 : vector<8x128xf32>
    %c31 = arith.constant 31 : index
    %375 = memref.load %arg1[%c31] : memref<128xf32, #tpu.memory_space<smem>>
    %c71 = arith.constant 71 : index
    %376 = memref.load %arg1[%c71] : memref<128xf32, #tpu.memory_space<smem>>
    %c111 = arith.constant 111 : index
    %377 = memref.load %arg1[%c111] : memref<128xf32, #tpu.memory_space<smem>>
    %378 = vector.broadcast %375 : f32 to vector<8x128xf32>
    %379 = arith.mulf %1, %378 : vector<8x128xf32>
    %380 = vector.broadcast %376 : f32 to vector<8x128xf32>
    %381 = arith.addf %379, %380 : vector<8x128xf32>
    %cst_33 = arith.constant 0.000000e+00 : f32
    %382 = vector.broadcast %cst_33 : f32 to vector<8x128xf32>
    %383 = arith.maximumf %381, %382 : vector<8x128xf32>
    %384 = vector.broadcast %377 : f32 to vector<8x128xf32>
    %385 = arith.mulf %384, %383 : vector<8x128xf32>
    %386 = arith.addf %374, %385 : vector<8x128xf32>
    %c32 = arith.constant 32 : index
    %387 = memref.load %arg1[%c32] : memref<128xf32, #tpu.memory_space<smem>>
    %c72 = arith.constant 72 : index
    %388 = memref.load %arg1[%c72] : memref<128xf32, #tpu.memory_space<smem>>
    %c112 = arith.constant 112 : index
    %389 = memref.load %arg1[%c112] : memref<128xf32, #tpu.memory_space<smem>>
    %390 = vector.broadcast %387 : f32 to vector<8x128xf32>
    %391 = arith.mulf %1, %390 : vector<8x128xf32>
    %392 = vector.broadcast %388 : f32 to vector<8x128xf32>
    %393 = arith.addf %391, %392 : vector<8x128xf32>
    %cst_34 = arith.constant 0.000000e+00 : f32
    %394 = vector.broadcast %cst_34 : f32 to vector<8x128xf32>
    %395 = arith.maximumf %393, %394 : vector<8x128xf32>
    %396 = vector.broadcast %389 : f32 to vector<8x128xf32>
    %397 = arith.mulf %396, %395 : vector<8x128xf32>
    %398 = arith.addf %386, %397 : vector<8x128xf32>
    %c33 = arith.constant 33 : index
    %399 = memref.load %arg1[%c33] : memref<128xf32, #tpu.memory_space<smem>>
    %c73 = arith.constant 73 : index
    %400 = memref.load %arg1[%c73] : memref<128xf32, #tpu.memory_space<smem>>
    %c113 = arith.constant 113 : index
    %401 = memref.load %arg1[%c113] : memref<128xf32, #tpu.memory_space<smem>>
    %402 = vector.broadcast %399 : f32 to vector<8x128xf32>
    %403 = arith.mulf %1, %402 : vector<8x128xf32>
    %404 = vector.broadcast %400 : f32 to vector<8x128xf32>
    %405 = arith.addf %403, %404 : vector<8x128xf32>
    %cst_35 = arith.constant 0.000000e+00 : f32
    %406 = vector.broadcast %cst_35 : f32 to vector<8x128xf32>
    %407 = arith.maximumf %405, %406 : vector<8x128xf32>
    %408 = vector.broadcast %401 : f32 to vector<8x128xf32>
    %409 = arith.mulf %408, %407 : vector<8x128xf32>
    %410 = arith.addf %398, %409 : vector<8x128xf32>
    %c34 = arith.constant 34 : index
    %411 = memref.load %arg1[%c34] : memref<128xf32, #tpu.memory_space<smem>>
    %c74 = arith.constant 74 : index
    %412 = memref.load %arg1[%c74] : memref<128xf32, #tpu.memory_space<smem>>
    %c114 = arith.constant 114 : index
    %413 = memref.load %arg1[%c114] : memref<128xf32, #tpu.memory_space<smem>>
    %414 = vector.broadcast %411 : f32 to vector<8x128xf32>
    %415 = arith.mulf %1, %414 : vector<8x128xf32>
    %416 = vector.broadcast %412 : f32 to vector<8x128xf32>
    %417 = arith.addf %415, %416 : vector<8x128xf32>
    %cst_36 = arith.constant 0.000000e+00 : f32
    %418 = vector.broadcast %cst_36 : f32 to vector<8x128xf32>
    %419 = arith.maximumf %417, %418 : vector<8x128xf32>
    %420 = vector.broadcast %413 : f32 to vector<8x128xf32>
    %421 = arith.mulf %420, %419 : vector<8x128xf32>
    %422 = arith.addf %410, %421 : vector<8x128xf32>
    %c35 = arith.constant 35 : index
    %423 = memref.load %arg1[%c35] : memref<128xf32, #tpu.memory_space<smem>>
    %c75 = arith.constant 75 : index
    %424 = memref.load %arg1[%c75] : memref<128xf32, #tpu.memory_space<smem>>
    %c115 = arith.constant 115 : index
    %425 = memref.load %arg1[%c115] : memref<128xf32, #tpu.memory_space<smem>>
    %426 = vector.broadcast %423 : f32 to vector<8x128xf32>
    %427 = arith.mulf %1, %426 : vector<8x128xf32>
    %428 = vector.broadcast %424 : f32 to vector<8x128xf32>
    %429 = arith.addf %427, %428 : vector<8x128xf32>
    %cst_37 = arith.constant 0.000000e+00 : f32
    %430 = vector.broadcast %cst_37 : f32 to vector<8x128xf32>
    %431 = arith.maximumf %429, %430 : vector<8x128xf32>
    %432 = vector.broadcast %425 : f32 to vector<8x128xf32>
    %433 = arith.mulf %432, %431 : vector<8x128xf32>
    %434 = arith.addf %422, %433 : vector<8x128xf32>
    %c36 = arith.constant 36 : index
    %435 = memref.load %arg1[%c36] : memref<128xf32, #tpu.memory_space<smem>>
    %c76 = arith.constant 76 : index
    %436 = memref.load %arg1[%c76] : memref<128xf32, #tpu.memory_space<smem>>
    %c116 = arith.constant 116 : index
    %437 = memref.load %arg1[%c116] : memref<128xf32, #tpu.memory_space<smem>>
    %438 = vector.broadcast %435 : f32 to vector<8x128xf32>
    %439 = arith.mulf %1, %438 : vector<8x128xf32>
    %440 = vector.broadcast %436 : f32 to vector<8x128xf32>
    %441 = arith.addf %439, %440 : vector<8x128xf32>
    %cst_38 = arith.constant 0.000000e+00 : f32
    %442 = vector.broadcast %cst_38 : f32 to vector<8x128xf32>
    %443 = arith.maximumf %441, %442 : vector<8x128xf32>
    %444 = vector.broadcast %437 : f32 to vector<8x128xf32>
    %445 = arith.mulf %444, %443 : vector<8x128xf32>
    %446 = arith.addf %434, %445 : vector<8x128xf32>
    %c37 = arith.constant 37 : index
    %447 = memref.load %arg1[%c37] : memref<128xf32, #tpu.memory_space<smem>>
    %c77 = arith.constant 77 : index
    %448 = memref.load %arg1[%c77] : memref<128xf32, #tpu.memory_space<smem>>
    %c117 = arith.constant 117 : index
    %449 = memref.load %arg1[%c117] : memref<128xf32, #tpu.memory_space<smem>>
    %450 = vector.broadcast %447 : f32 to vector<8x128xf32>
    %451 = arith.mulf %1, %450 : vector<8x128xf32>
    %452 = vector.broadcast %448 : f32 to vector<8x128xf32>
    %453 = arith.addf %451, %452 : vector<8x128xf32>
    %cst_39 = arith.constant 0.000000e+00 : f32
    %454 = vector.broadcast %cst_39 : f32 to vector<8x128xf32>
    %455 = arith.maximumf %453, %454 : vector<8x128xf32>
    %456 = vector.broadcast %449 : f32 to vector<8x128xf32>
    %457 = arith.mulf %456, %455 : vector<8x128xf32>
    %458 = arith.addf %446, %457 : vector<8x128xf32>
    %c38 = arith.constant 38 : index
    %459 = memref.load %arg1[%c38] : memref<128xf32, #tpu.memory_space<smem>>
    %c78 = arith.constant 78 : index
    %460 = memref.load %arg1[%c78] : memref<128xf32, #tpu.memory_space<smem>>
    %c118 = arith.constant 118 : index
    %461 = memref.load %arg1[%c118] : memref<128xf32, #tpu.memory_space<smem>>
    %462 = vector.broadcast %459 : f32 to vector<8x128xf32>
    %463 = arith.mulf %1, %462 : vector<8x128xf32>
    %464 = vector.broadcast %460 : f32 to vector<8x128xf32>
    %465 = arith.addf %463, %464 : vector<8x128xf32>
    %cst_40 = arith.constant 0.000000e+00 : f32
    %466 = vector.broadcast %cst_40 : f32 to vector<8x128xf32>
    %467 = arith.maximumf %465, %466 : vector<8x128xf32>
    %468 = vector.broadcast %461 : f32 to vector<8x128xf32>
    %469 = arith.mulf %468, %467 : vector<8x128xf32>
    %470 = arith.addf %458, %469 : vector<8x128xf32>
    %c39 = arith.constant 39 : index
    %471 = memref.load %arg1[%c39] : memref<128xf32, #tpu.memory_space<smem>>
    %c79 = arith.constant 79 : index
    %472 = memref.load %arg1[%c79] : memref<128xf32, #tpu.memory_space<smem>>
    %c119 = arith.constant 119 : index
    %473 = memref.load %arg1[%c119] : memref<128xf32, #tpu.memory_space<smem>>
    %474 = vector.broadcast %471 : f32 to vector<8x128xf32>
    %475 = arith.mulf %1, %474 : vector<8x128xf32>
    %476 = vector.broadcast %472 : f32 to vector<8x128xf32>
    %477 = arith.addf %475, %476 : vector<8x128xf32>
    %cst_41 = arith.constant 0.000000e+00 : f32
    %478 = vector.broadcast %cst_41 : f32 to vector<8x128xf32>
    %479 = arith.maximumf %477, %478 : vector<8x128xf32>
    %480 = vector.broadcast %473 : f32 to vector<8x128xf32>
    %481 = arith.mulf %480, %479 : vector<8x128xf32>
    %482 = arith.addf %470, %481 : vector<8x128xf32>
    %483 = vector.broadcast %0 : f32 to vector<8x128xf32>
    %484 = arith.addf %482, %483 : vector<8x128xf32>
    %c0_42 = arith.constant 0 : index
    %c0_43 = arith.constant 0 : index
    %485 = vector.load %arg3[%c0_42, %c0_43] : memref<8x128xf32, #tpu.memory_space<vmem>>, vector<8x128xf32>
    tpu.vector_store %arg3[%c0_42, %c0_43], %484 {strides = array<i32>} : memref<8x128xf32, #tpu.memory_space<vmem>>, vector<8x128xf32>,
    return
  }
  func.func @transform_0(%arg0: i32) -> i32 {
    %c0_i32 = arith.constant 0 : i32
    %c0_i32_0 = arith.constant 0 : i32
    return %c0_i32 : i32
  }
  func.func @transform_1(%arg0: i32) -> (i32, i32) {
    %c0_i32 = arith.constant 0 : i32
    %c0_i32_0 = arith.constant 0 : i32
    return %arg0, %c0_i32 : i32, i32
  }
  func.func @transform_2(%arg0: i32) -> (i32, i32) {
    %c0_i32 = arith.constant 0 : i32
    %c0_i32_0 = arith.constant 0 : i32
    return %arg0, %c0_i32 : i32, i32
  }
}

</mosaic_0001>

<llo_original>
// kernel: tpu_custom_call.1
$region0: #{tpu_custom_call.1}
  #allocation0 [shape = 'u32[]', space=smem, size = 0x4, offset = 0x4, fixed_abs, tag = 'smem constant byte address 0x4 - core index']
  #allocation1 [shape = 'u32[144,128]{1,0:T(1,128)}', space=vmem, size = 0x12000, scoped, tag = 'internal scratch']
  %s0 = inlined_call_operand.hbm [shape: f32[128], index: 0, kind: input, shape index: {}]
  %s1 = inlined_call_operand.hbm [shape: f32[8,128], index: 1, kind: input, shape index: {}]
  %s2 = inlined_call_operand.hbm [shape: f32[8,128], index: 2, kind: output, shape index: {}]
  %s3 = sld [smem:[#allocation0]]
  $region26: #{tpu_custom_call.1} parent=0
    _
  %s5 = ssub.s32 1, %s3
  %s6 = scalar_select 0, %s5, %s3
  $region1: #{tpu_custom_call.1} parent=0
    #allocation2 [shape = 'u8[512]{0}', space=smem, size = 0x200, scoped, tag = 'input window, operand 0, single buffered']
    #allocation3 [shape = 's32[1]{0}', space=sflag, size = 0x4, scoped, tag = 'scoped memory for tpu_custom_call.1']
    #allocation4 [shape = 's32[1]{0}', space=sflag, size = 0x4, scoped, tag = 'scoped memory for tpu_custom_call.1']
    #allocation5 [shape = 's32[1]{0}', space=sflag, size = 0x4, scoped, tag = 'scoped memory for tpu_custom_call.1']
    #allocation6 [shape = 'u8[4096]{0}', space=vmem, size = 0x1000, scoped, tag = 'input window, operand 1, single buffered']
    #allocation7 [shape = 'u8[4096]{0}', space=vmem, size = 0x1000, scoped, tag = 'output window, operand 0, single buffered']
    %7 = vsyncpa [#allocation5], 0
    %8 = vsyncpa [#allocation3], 0
    %9 = vsyncpa [#allocation4], 0
    // Predicated region
    $region2: #{tpu_custom_call.1} parent=1 // pred_check
      _
    $region3: #{tpu_custom_call.1} parent=1 // pred_check_branch
      %11 = sbr.rel (0) target = $region5
    $region4: #{tpu_custom_call.1} parent=1 // pred_region
      %s13 = ssub.s32 16, 16
      %14 = vsyncadd [#allocation5], %s13
      %17 = dma.hbm_to_smem %s0, 16, [#allocation2], [#allocation5]
    $region5: #{tpu_custom_call.1} parent=1 // pred_fallthru
      _
    // Predicated region
    $region6: #{tpu_custom_call.1} parent=1 // pred_check
      _
    $region7: #{tpu_custom_call.1} parent=1 // pred_check_branch
      %19 = sbr.rel (0) target = $region9
    $region8: #{tpu_custom_call.1} parent=1 // pred_region
      %s21 = ssub.s32 128, 128
      %22 = vsyncadd [#allocation3], %s21
      %s24 = sshll.u32 [#allocation6], 4
      %s25 = int_to_ptr.vmem [resolvable:$true] %s24
      %27 = dma.hbm_to_vmem [thread:$0]  %s1, 128, %s25, [#allocation3]
    $region9: #{tpu_custom_call.1} parent=1 // pred_fallthru
      _
    // Predicated region
    $region10: #{tpu_custom_call.1} parent=1 // pred_check
      _
    $region11: #{tpu_custom_call.1} parent=1 // pred_check_branch
      %29 = sbr.rel (0) target = $region13
    $region12: #{tpu_custom_call.1} parent=1 // pred_region
      %30 = dma.done [#allocation5], 16
    $region13: #{tpu_custom_call.1} parent=1 // pred_fallthru
      _
    // Predicated region
    $region14: #{tpu_custom_call.1} parent=1 // pred_check
      _
    $region15: #{tpu_custom_call.1} parent=1 // pred_check_branch
      %32 = sbr.rel (0) target = $region17
    $region16: #{tpu_custom_call.1} parent=1 // pred_region
      %33 = dma.done [#allocation3], 128
    $region17: #{tpu_custom_call.1} parent=1 // pred_fallthru
      _
    %34 = sfence
    %s35 = sld [smem:[#allocation2 + $0x78]]
    %v36 = vld [vmem:[#allocation6] sm:$0xff]
    %s37 = sld [smem:[#allocation2]]
    %s38 = sld [smem:[#allocation2 + $0x28]]
    %s39 = sld [smem:[#allocation2 + $0x50]]
    %v40 = vstv %s37
    %v41 = vmul.f32 %v36, %v40
    %v42 = vstv %s38
    %v43 = vadd.f32 %v41, %v42
    %v44 = vmax.f32 %v43, 0.0
    %v45 = vstv %s39
    %v46 = vmul.f32 %v45, %v44
    %v47 = vadd.f32 %v46, 0.0
    %s48 = sld [smem:[#allocation2 + $0x1]]
    %s49 = sld [smem:[#allocation2 + $0x29]]
    %s50 = sld [smem:[#allocation2 + $0x51]]
    %v51 = vstv %s48
    %v52 = vmul.f32 %v36, %v51
    %v53 = vstv %s49
    %v54 = vadd.f32 %v52, %v53
    %v55 = vmax.f32 %v54, 0.0
    %v56 = vstv %s50
    %v57 = vmul.f32 %v56, %v55
    %v58 = vadd.f32 %v47, %v57
    %s59 = sld [smem:[#allocation2 + $0x2]]
    %s60 = sld [smem:[#allocation2 + $0x2a]]
    %s61 = sld [smem:[#allocation2 + $0x52]]
    %v62 = vstv %s59
    %v63 = vmul.f32 %v36, %v62
    %v64 = vstv %s60
    %v65 = vadd.f32 %v63, %v64
    %v66 = vmax.f32 %v65, 0.0
    %v67 = vstv %s61
    %v68 = vmul.f32 %v67, %v66
    %v69 = vadd.f32 %v58, %v68
    %s70 = sld [smem:[#allocation2 + $0x3]]
    %s71 = sld [smem:[#allocation2 + $0x2b]]
    %s72 = sld [smem:[#allocation2 + $0x53]]
    %v73 = vstv %s70
    %v74 = vmul.f32 %v36, %v73
    %v75 = vstv %s71
    %v76 = vadd.f32 %v74, %v75
    %v77 = vmax.f32 %v76, 0.0
    %v78 = vstv %s72
    %v79 = vmul.f32 %v78, %v77
    %v80 = vadd.f32 %v69, %v79
    %s81 = sld [smem:[#allocation2 + $0x4]]
    %s82 = sld [smem:[#allocation2 + $0x2c]]
    %s83 = sld [smem:[#allocation2 + $0x54]]
    %v84 = vstv %s81
    %v85 = vmul.f32 %v36, %v84
    %v86 = vstv %s82
    %v87 = vadd.f32 %v85, %v86
    %v88 = vmax.f32 %v87, 0.0
    %v89 = vstv %s83
    %v90 = vmul.f32 %v89, %v88
    %v91 = vadd.f32 %v80, %v90
    %s92 = sld [smem:[#allocation2 + $0x5]]
    %s93 = sld [smem:[#allocation2 + $0x2d]]
    %s94 = sld [smem:[#allocation2 + $0x55]]
    %v95 = vstv %s92
    %v96 = vmul.f32 %v36, %v95
    %v97 = vstv %s93
    %v98 = vadd.f32 %v96, %v97
    %v99 = vmax.f32 %v98, 0.0
    %v100 = vstv %s94
    %v101 = vmul.f32 %v100, %v99
    %v102 = vadd.f32 %v91, %v101
    %s103 = sld [smem:[#allocation2 + $0x6]]
    %s104 = sld [smem:[#allocation2 + $0x2e]]
    %s105 = sld [smem:[#allocation2 + $0x56]]
    %v106 = vstv %s103
    %v107 = vmul.f32 %v36, %v106
    %v108 = vstv %s104
    %v109 = vadd.f32 %v107, %v108
    %v110 = vmax.f32 %v109, 0.0
    %v111 = vstv %s105
    %v112 = vmul.f32 %v111, %v110
    %v113 = vadd.f32 %v102, %v112
    %s114 = sld [smem:[#allocation2 + $0x7]]
    %s115 = sld [smem:[#allocation2 + $0x2f]]
    %s116 = sld [smem:[#allocation2 + $0x57]]
    %v117 = vstv %s114
    %v118 = vmul.f32 %v36, %v117
    %v119 = vstv %s115
    %v120 = vadd.f32 %v118, %v119
    %v121 = vmax.f32 %v120, 0.0
    %v122 = vstv %s116
    %v123 = vmul.f32 %v122, %v121
    %v124 = vadd.f32 %v113, %v123
    %s125 = sld [smem:[#allocation2 + $0x8]]
    %s126 = sld [smem:[#allocation2 + $0x30]]
    %s127 = sld [smem:[#allocation2 + $0x58]]
    %v128 = vstv %s125
    %v129 = vmul.f32 %v36, %v128
    %v130 = vstv %s126
    %v131 = vadd.f32 %v129, %v130
    %v132 = vmax.f32 %v131, 0.0
    %v133 = vstv %s127
    %v134 = vmul.f32 %v133, %v132
    %v135 = vadd.f32 %v124, %v134
    %s136 = sld [smem:[#allocation2 + $0x9]]
    %s137 = sld [smem:[#allocation2 + $0x31]]
    %s138 = sld [smem:[#allocation2 + $0x59]]
    %v139 = vstv %s136
    %v140 = vmul.f32 %v36, %v139
    %v141 = vstv %s137
    %v142 = vadd.f32 %v140, %v141
    %v143 = vmax.f32 %v142, 0.0
    %v144 = vstv %s138
    %v145 = vmul.f32 %v144, %v143
    %v146 = vadd.f32 %v135, %v145
    %s147 = sld [smem:[#allocation2 + $0xa]]
    %s148 = sld [smem:[#allocation2 + $0x32]]
    %s149 = sld [smem:[#allocation2 + $0x5a]]
    %v150 = vstv %s147
    %v151 = vmul.f32 %v36, %v150
    %v152 = vstv %s148
    %v153 = vadd.f32 %v151, %v152
    %v154 = vmax.f32 %v153, 0.0
    %v155 = vstv %s149
    %v156 = vmul.f32 %v155, %v154
    %v157 = vadd.f32 %v146, %v156
    %s158 = sld [smem:[#allocation2 + $0xb]]
    %s159 = sld [smem:[#allocation2 + $0x33]]
    %s160 = sld [smem:[#allocation2 + $0x5b]]
    %v161 = vstv %s158
    %v162 = vmul.f32 %v36, %v161
    %v163 = vstv %s159
    %v164 = vadd.f32 %v162, %v163
    %v165 = vmax.f32 %v164, 0.0
    %v166 = vstv %s160
    %v167 = vmul.f32 %v166, %v165
    %v168 = vadd.f32 %v157, %v167
    %s169 = sld [smem:[#allocation2 + $0xc]]
    %s170 = sld [smem:[#allocation2 + $0x34]]
    %s171 = sld [smem:[#allocation2 + $0x5c]]
    %v172 = vstv %s169
    %v173 = vmul.f32 %v36, %v172
    %v174 = vstv %s170
    %v175 = vadd.f32 %v173, %v174
    %v176 = vmax.f32 %v175, 0.0
    %v177 = vstv %s171
    %v178 = vmul.f32 %v177, %v176
    %v179 = vadd.f32 %v168, %v178
    %s180 = sld [smem:[#allocation2 + $0xd]]
    %s181 = sld [smem:[#allocation2 + $0x35]]
    %s182 = sld [smem:[#allocation2 + $0x5d]]
    %v183 = vstv %s180
    %v184 = vmul.f32 %v36, %v183
    %v185 = vstv %s181
    %v186 = vadd.f32 %v184, %v185
    %v187 = vmax.f32 %v186, 0.0
    %v188 = vstv %s182
    %v189 = vmul.f32 %v188, %v187
    %v190 = vadd.f32 %v179, %v189
    %s191 = sld [smem:[#allocation2 + $0xe]]
    %s192 = sld [smem:[#allocation2 + $0x36]]
    %s193 = sld [smem:[#allocation2 + $0x5e]]
    %v194 = vstv %s191
    %v195 = vmul.f32 %v36, %v194
    %v196 = vstv %s192
    %v197 = vadd.f32 %v195, %v196
    %v198 = vmax.f32 %v197, 0.0
    %v199 = vstv %s193
    %v200 = vmul.f32 %v199, %v198
    %v201 = vadd.f32 %v190, %v200
    %s202 = sld [smem:[#allocation2 + $0xf]]
    %s203 = sld [smem:[#allocation2 + $0x37]]
    %s204 = sld [smem:[#allocation2 + $0x5f]]
    %v205 = vstv %s202
    %v206 = vmul.f32 %v36, %v205
    %v207 = vstv %s203
    %v208 = vadd.f32 %v206, %v207
    %v209 = vmax.f32 %v208, 0.0
    %v210 = vstv %s204
    %v211 = vmul.f32 %v210, %v209
    %v212 = vadd.f32 %v201, %v211
    %s213 = sld [smem:[#allocation2 + $0x10]]
    %s214 = sld [smem:[#allocation2 + $0x38]]
    %s215 = sld [smem:[#allocation2 + $0x60]]
    %v216 = vstv %s213
    %v217 = vmul.f32 %v36, %v216
    %v218 = vstv %s214
    %v219 = vadd.f32 %v217, %v218
    %v220 = vmax.f32 %v219, 0.0
    %v221 = vstv %s215
    %v222 = vmul.f32 %v221, %v220
    %v223 = vadd.f32 %v212, %v222
    %s224 = sld [smem:[#allocation2 + $0x11]]
    %s225 = sld [smem:[#allocation2 + $0x39]]
    %s226 = sld [smem:[#allocation2 + $0x61]]
    %v227 = vstv %s224
    %v228 = vmul.f32 %v36, %v227
    %v229 = vstv %s225
    %v230 = vadd.f32 %v228, %v229
    %v231 = vmax.f32 %v230, 0.0
    %v232 = vstv %s226
    %v233 = vmul.f32 %v232, %v231
    %v234 = vadd.f32 %v223, %v233
    %s235 = sld [smem:[#allocation2 + $0x12]]
    %s236 = sld [smem:[#allocation2 + $0x3a]]
    %s237 = sld [smem:[#allocation2 + $0x62]]
    %v238 = vstv %s235
    %v239 = vmul.f32 %v36, %v238
    %v240 = vstv %s236
    %v241 = vadd.f32 %v239, %v240
    %v242 = vmax.f32 %v241, 0.0
    %v243 = vstv %s237
    %v244 = vmul.f32 %v243, %v242
    %v245 = vadd.f32 %v234, %v244
    %s246 = sld [smem:[#allocation2 + $0x13]]
    %s247 = sld [smem:[#allocation2 + $0x3b]]
    %s248 = sld [smem:[#allocation2 + $0x63]]
    %v249 = vstv %s246
    %v250 = vmul.f32 %v36, %v249
    %v251 = vstv %s247
    %v252 = vadd.f32 %v250, %v251
    %v253 = vmax.f32 %v252, 0.0
    %v254 = vstv %s248
    %v255 = vmul.f32 %v254, %v253
    %v256 = vadd.f32 %v245, %v255
    %s257 = sld [smem:[#allocation2 + $0x14]]
    %s258 = sld [smem:[#allocation2 + $0x3c]]
    %s259 = sld [smem:[#allocation2 + $0x64]]
    %v260 = vstv %s257
    %v261 = vmul.f32 %v36, %v260
    %v262 = vstv %s258
    %v263 = vadd.f32 %v261, %v262
    %v264 = vmax.f32 %v263, 0.0
    %v265 = vstv %s259
    %v266 = vmul.f32 %v265, %v264
    %v267 = vadd.f32 %v256, %v266
    %s268 = sld [smem:[#allocation2 + $0x15]]
    %s269 = sld [smem:[#allocation2 + $0x3d]]
    %s270 = sld [smem:[#allocation2 + $0x65]]
    %v271 = vstv %s268
    %v272 = vmul.f32 %v36, %v271
    %v273 = vstv %s269
    %v274 = vadd.f32 %v272, %v273
    %v275 = vmax.f32 %v274, 0.0
    %v276 = vstv %s270
    %v277 = vmul.f32 %v276, %v275
    %v278 = vadd.f32 %v267, %v277
    %s279 = sld [smem:[#allocation2 + $0x16]]
    %s280 = sld [smem:[#allocation2 + $0x3e]]
    %s281 = sld [smem:[#allocation2 + $0x66]]
    %v282 = vstv %s279
    %v283 = vmul.f32 %v36, %v282
    %v284 = vstv %s280
    %v285 = vadd.f32 %v283, %v284
    %v286 = vmax.f32 %v285, 0.0
    %v287 = vstv %s281
    %v288 = vmul.f32 %v287, %v286
    %v289 = vadd.f32 %v278, %v288
    %s290 = sld [smem:[#allocation2 + $0x17]]
    %s291 = sld [smem:[#allocation2 + $0x3f]]
    %s292 = sld [smem:[#allocation2 + $0x67]]
    %v293 = vstv %s290
    %v294 = vmul.f32 %v36, %v293
    %v295 = vstv %s291
    %v296 = vadd.f32 %v294, %v295
    %v297 = vmax.f32 %v296, 0.0
    %v298 = vstv %s292
    %v299 = vmul.f32 %v298, %v297
    %v300 = vadd.f32 %v289, %v299
    %s301 = sld [smem:[#allocation2 + $0x18]]
    %s302 = sld [smem:[#allocation2 + $0x40]]
    %s303 = sld [smem:[#allocation2 + $0x68]]
    %v304 = vstv %s301
    %v305 = vmul.f32 %v36, %v304
    %v306 = vstv %s302
    %v307 = vadd.f32 %v305, %v306
    %v308 = vmax.f32 %v307, 0.0
    %v309 = vstv %s303
    %v310 = vmul.f32 %v309, %v308
    %v311 = vadd.f32 %v300, %v310
    %s312 = sld [smem:[#allocation2 + $0x19]]
    %s313 = sld [smem:[#allocation2 + $0x41]]
    %s314 = sld [smem:[#allocation2 + $0x69]]
    %v315 = vstv %s312
    %v316 = vmul.f32 %v36, %v315
    %v317 = vstv %s313
    %v318 = vadd.f32 %v316, %v317
    %v319 = vmax.f32 %v318, 0.0
    %v320 = vstv %s314
    %v321 = vmul.f32 %v320, %v319
    %v322 = vadd.f32 %v311, %v321
    %s323 = sld [smem:[#allocation2 + $0x1a]]
    %s324 = sld [smem:[#allocation2 + $0x42]]
    %s325 = sld [smem:[#allocation2 + $0x6a]]
    %v326 = vstv %s323
    %v327 = vmul.f32 %v36, %v326
    %v328 = vstv %s324
    %v329 = vadd.f32 %v327, %v328
    %v330 = vmax.f32 %v329, 0.0
    %v331 = vstv %s325
    %v332 = vmul.f32 %v331, %v330
    %v333 = vadd.f32 %v322, %v332
    %s334 = sld [smem:[#allocation2 + $0x1b]]
    %s335 = sld [smem:[#allocation2 + $0x43]]
    %s336 = sld [smem:[#allocation2 + $0x6b]]
    %v337 = vstv %s334
    %v338 = vmul.f32 %v36, %v337
    %v339 = vstv %s335
    %v340 = vadd.f32 %v338, %v339
    %v341 = vmax.f32 %v340, 0.0
    %v342 = vstv %s336
    %v343 = vmul.f32 %v342, %v341
    %v344 = vadd.f32 %v333, %v343
    %s345 = sld [smem:[#allocation2 + $0x1c]]
    %s346 = sld [smem:[#allocation2 + $0x44]]
    %s347 = sld [smem:[#allocation2 + $0x6c]]
    %v348 = vstv %s345
    %v349 = vmul.f32 %v36, %v348
    %v350 = vstv %s346
    %v351 = vadd.f32 %v349, %v350
    %v352 = vmax.f32 %v351, 0.0
    %v353 = vstv %s347
    %v354 = vmul.f32 %v353, %v352
    %v355 = vadd.f32 %v344, %v354
    %s356 = sld [smem:[#allocation2 + $0x1d]]
    %s357 = sld [smem:[#allocation2 + $0x45]]
    %s358 = sld [smem:[#allocation2 + $0x6d]]
    %v359 = vstv %s356
    %v360 = vmul.f32 %v36, %v359
    %v361 = vstv %s357
    %v362 = vadd.f32 %v360, %v361
    %v363 = vmax.f32 %v362, 0.0
    %v364 = vstv %s358
    %v365 = vmul.f32 %v364, %v363
    %v366 = vadd.f32 %v355, %v365
    %s367 = sld [smem:[#allocation2 + $0x1e]]
    %s368 = sld [smem:[#allocation2 + $0x46]]
    %s369 = sld [smem:[#allocation2 + $0x6e]]
    %v370 = vstv %s367
    %v371 = vmul.f32 %v36, %v370
    %v372 = vstv %s368
    %v373 = vadd.f32 %v371, %v372
    %v374 = vmax.f32 %v373, 0.0
    %v375 = vstv %s369
    %v376 = vmul.f32 %v375, %v374
    %v377 = vadd.f32 %v366, %v376
    %s378 = sld [smem:[#allocation2 + $0x1f]]
    %s379 = sld [smem:[#allocation2 + $0x47]]
    %s380 = sld [smem:[#allocation2 + $0x6f]]
    %v381 = vstv %s378
    %v382 = vmul.f32 %v36, %v381
    %v383 = vstv %s379
    %v384 = vadd.f32 %v382, %v383
    %v385 = vmax.f32 %v384, 0.0
    %v386 = vstv %s380
    %v387 = vmul.f32 %v386, %v385
    %v388 = vadd.f32 %v377, %v387
    %s389 = sld [smem:[#allocation2 + $0x20]]
    %s390 = sld [smem:[#allocation2 + $0x48]]
    %s391 = sld [smem:[#allocation2 + $0x70]]
    %v392 = vstv %s389
    %v393 = vmul.f32 %v36, %v392
    %v394 = vstv %s390
    %v395 = vadd.f32 %v393, %v394
    %v396 = vmax.f32 %v395, 0.0
    %v397 = vstv %s391
    %v398 = vmul.f32 %v397, %v396
    %v399 = vadd.f32 %v388, %v398
    %s400 = sld [smem:[#allocation2 + $0x21]]
    %s401 = sld [smem:[#allocation2 + $0x49]]
    %s402 = sld [smem:[#allocation2 + $0x71]]
    %v403 = vstv %s400
    %v404 = vmul.f32 %v36, %v403
    %v405 = vstv %s401
    %v406 = vadd.f32 %v404, %v405
    %v407 = vmax.f32 %v406, 0.0
    %v408 = vstv %s402
    %v409 = vmul.f32 %v408, %v407
    %v410 = vadd.f32 %v399, %v409
    %s411 = sld [smem:[#allocation2 + $0x22]]
    %s412 = sld [smem:[#allocation2 + $0x4a]]
    %s413 = sld [smem:[#allocation2 + $0x72]]
    %v414 = vstv %s411
    %v415 = vmul.f32 %v36, %v414
    %v416 = vstv %s412
    %v417 = vadd.f32 %v415, %v416
    %v418 = vmax.f32 %v417, 0.0
    %v419 = vstv %s413
    %v420 = vmul.f32 %v419, %v418
    %v421 = vadd.f32 %v410, %v420
    %s422 = sld [smem:[#allocation2 + $0x23]]
    %s423 = sld [smem:[#allocation2 + $0x4b]]
    %s424 = sld [smem:[#allocation2 + $0x73]]
    %v425 = vstv %s422
    %v426 = vmul.f32 %v36, %v425
    %v427 = vstv %s423
    %v428 = vadd.f32 %v426, %v427
    %v429 = vmax.f32 %v428, 0.0
    %v430 = vstv %s424
    %v431 = vmul.f32 %v430, %v429
    %v432 = vadd.f32 %v421, %v431
    %s433 = sld [smem:[#allocation2 + $0x24]]
    %s434 = sld [smem:[#allocation2 + $0x4c]]
    %s435 = sld [smem:[#allocation2 + $0x74]]
    %v436 = vstv %s433
    %v437 = vmul.f32 %v36, %v436
    %v438 = vstv %s434
    %v439 = vadd.f32 %v437, %v438
    %v440 = vmax.f32 %v439, 0.0
    %v441 = vstv %s435
    %v442 = vmul.f32 %v441, %v440
    %v443 = vadd.f32 %v432, %v442
    %s444 = sld [smem:[#allocation2 + $0x25]]
    %s445 = sld [smem:[#allocation2 + $0x4d]]
    %s446 = sld [smem:[#allocation2 + $0x75]]
    %v447 = vstv %s444
    %v448 = vmul.f32 %v36, %v447
    %v449 = vstv %s445
    %v450 = vadd.f32 %v448, %v449
    %v451 = vmax.f32 %v450, 0.0
    %v452 = vstv %s446
    %v453 = vmul.f32 %v452, %v451
    %v454 = vadd.f32 %v443, %v453
    %s455 = sld [smem:[#allocation2 + $0x26]]
    %s456 = sld [smem:[#allocation2 + $0x4e]]
    %s457 = sld [smem:[#allocation2 + $0x76]]
    %v458 = vstv %s455
    %v459 = vmul.f32 %v36, %v458
    %v460 = vstv %s456
    %v461 = vadd.f32 %v459, %v460
    %v462 = vmax.f32 %v461, 0.0
    %v463 = vstv %s457
    %v464 = vmul.f32 %v463, %v462
    %v465 = vadd.f32 %v454, %v464
    %s466 = sld [smem:[#allocation2 + $0x27]]
    %s467 = sld [smem:[#allocation2 + $0x4f]]
    %s468 = sld [smem:[#allocation2 + $0x77]]
    %v469 = vstv %s466
    %v470 = vmul.f32 %v36, %v469
    %v471 = vstv %s467
    %v472 = vadd.f32 %v470, %v471
    %v473 = vmax.f32 %v472, 0.0
    %v474 = vstv %s468
    %v475 = vmul.f32 %v474, %v473
    %v476 = vadd.f32 %v465, %v475
    %v477 = vstv %s35
    %v478 = vadd.f32 %v476, %v477
    %479 = vst [vmem:[#allocation7] sm:$0xff] %v478
    // Predicated region
    $region18: #{tpu_custom_call.1} parent=1 // pred_check
      _
    $region19: #{tpu_custom_call.1} parent=1 // pred_check_branch
      %481 = sbr.rel (0) target = $region21
    $region20: #{tpu_custom_call.1} parent=1 // pred_region
      %s483 = ssub.s32 128, 128
      %484 = vsyncadd [#allocation4], %s483
      %s486 = sshll.u32 [#allocation7], 4
      %s487 = int_to_ptr.vmem [resolvable:$true] %s486
      %489 = dma.vmem_to_hbm [thread:$0]  %s487, 128, %s2, [#allocation4]
    $region21: #{tpu_custom_call.1} parent=1 // pred_fallthru
      _
    // Predicated region
    $region22: #{tpu_custom_call.1} parent=1 // pred_check
      _
    $region23: #{tpu_custom_call.1} parent=1 // pred_check_branch
      %491 = sbr.rel (0) target = $region25
    $region24: #{tpu_custom_call.1} parent=1 // pred_region
      %492 = dma.done [#allocation4], 128
    $region25: #{tpu_custom_call.1} parent=1 // pred_fallthru
      _
    %493 = vsyncpa [#allocation3], 1
    %494 = vsyncpa [#allocation4], 1
    %495 = vsyncpa [#allocation5], 1

</llo_original>
